<compile_context>
chip_gen: v6e
topology: v6e:2x2x1
jax: 0.10.0
libtpu: 0.0.40
codegen_flags: <defaults>
</compile_context>

<pallas_src>
import jax
import jax.numpy as jnp
from jax.experimental import pallas as pl
from jax.experimental.pallas import tpu as pltpu


def _round_up(n, m):
    return ((n + m - 1) // m) * m


def _critic_kernel(x_ref, u_ref, w1x_ref, w1u_ref, b1_ref, w2_ref, b2_ref,
                   out_ref):
    # Layer 1, split across the two streamed operands (mathematically identical
    # to concat([x, u], 1) @ W1): two small MXU passes, f32 accumulation.
    h = jnp.dot(x_ref[...], w1x_ref[...], preferred_element_type=jnp.float32)
    h = h + jnp.dot(u_ref[...], w1u_ref[...], preferred_element_type=jnp.float32)
    h = jnp.maximum(h + b1_ref[...], 0.0)
    # Layer 2 (out_features == 1): VPU multiply + XLU cross-lane reduction
    # instead of an N=1 MXU matmul that would waste 127/128 output lanes.
    q = jnp.sum(h * w2_ref[...], axis=-1, keepdims=True) + b2_ref[0, 0]
    out_ref[...] = q.astype(out_ref.dtype)


def ddpg_critic_forward(x, u, params, *, block_b=2048,
                        compute_dtype=jnp.bfloat16):
    """x: (B, state_dim), u: (B, action_dim) -> q: (B, 1) float32."""
    w1, b1, w2, b2 = params
    B, S = x.shape
    A = u.shape[1]
    hidden = w1.shape[1]

    # Split W1 once in the wrapper (tiny, VMEM-resident weights); the streamed
    # x/u operands are fed directly -- no (B, S+A) concat is ever materialized.
    w1x, w1u = w1[:S], w1[S:]

    def _cast(a):
        return a if a.dtype == compute_dtype else a.astype(compute_dtype)

    xc, uc = _cast(x), _cast(u)
    w1xc, w1uc = _cast(w1x), _cast(w1u)

    # Batch tiling: stream activation tiles through VMEM (double-buffered by
    # the BlockSpec pipeline); weights/biases stay resident across steps.
    if B <= 8:
        # A block equal to the full array dims is always legal.
        tb, Bp = B, B
    else:
        # Rows a multiple of 8, capped at block_b, and at least 2 grid steps
        # so v7x's two TensorCores both get work (neutral on v5e/v6e).
        tb = min(block_b, _round_up(pl.cdiv(B, 2), 8))
        Bp = _round_up(B, tb)
    if Bp != B:
        pad = Bp - B
        xc = jnp.pad(xc, ((0, pad), (0, 0)))
        uc = jnp.pad(uc, ((0, pad), (0, 0)))
    grid = (Bp // tb,)

    out = pl.pallas_call(
        _critic_kernel,
        out_shape=jax.ShapeDtypeStruct((Bp, 1), jnp.float32),
        grid=grid,
        in_specs=[
            pl.BlockSpec((tb, S), lambda i: (i, 0)),         # x: streamed
            pl.BlockSpec((tb, A), lambda i: (i, 0)),         # u: streamed
            pl.BlockSpec((S, hidden), lambda i: (0, 0)),     # W1[:S]: resident
            pl.BlockSpec((A, hidden), lambda i: (0, 0)),     # W1[S:]: resident
            pl.BlockSpec((1, hidden), lambda i: (0, 0)),     # b1: resident
            pl.BlockSpec((1, hidden), lambda i: (0, 0)),     # w2 row: resident
            pl.BlockSpec(memory_space=pltpu.SMEM),           # b2: SMEM scalar
        ],
        out_specs=pl.BlockSpec((tb, 1), lambda i: (i, 0)),
        compiler_params=pltpu.CompilerParams(
            dimension_semantics=("parallel",),   # megacore / dual-TC sharding
            vmem_limit_bytes=32 * 1024 * 1024,   # safe for v7x scoped VMEM
        ),
    )(xc, uc, w1xc, w1uc, b1, w2, b2)
    return out[:B]


def init_params(key, state_dim, action_dim, hidden_size):
    """Deterministic synthetic parameters mirroring nn.Linear default init
    (uniform(-1/sqrt(fan_in), 1/sqrt(fan_in)))."""
    k1, k2, k3, k4 = jax.random.split(key, 4)
    in1 = state_dim + action_dim
    bound1 = 1.0 / jnp.sqrt(jnp.float32(in1))
    bound2 = 1.0 / jnp.sqrt(jnp.float32(hidden_size))

    # W1 in PyTorch is (hidden, in1); stored transposed as (in1, hidden).
    w1 = jax.random.uniform(k1, (in1, hidden_size), jnp.float32, -bound1, bound1)
    b1 = jax.random.uniform(k2, (1, hidden_size), jnp.float32, -bound1, bound1)
    # W2 in PyTorch is (1, hidden); stored as a (1, hidden) row for the VPU path.
    w2 = jax.random.uniform(k3, (1, hidden_size), jnp.float32, -bound2, bound2)
    b2 = jax.random.uniform(k4, (1, 1), jnp.float32, -bound2, bound2)
    return (w1, b1, w2, b2)


def reference_forward(x, u, params):
    """Pure-JAX f32 reference identical to the PyTorch forward."""
    w1, b1, w2, b2 = params
    h = jnp.maximum(jnp.concatenate([x, u], axis=1) @ w1 + b1, 0.0)
    return h @ w2.T + b2


if __name__ == "__main__":
    state_dim = 16
    action_dim = 4
    hidden_size = 32
    batch = 2
    # max_action is unused in the critic's forward (matches the PyTorch module).

    key = jax.random.PRNGKey(0)
    kx, ku, kp = jax.random.split(key, 3)

    x = jax.random.normal(kx, (batch, state_dim), jnp.float32)
    u = jax.random.normal(ku, (batch, action_dim), jnp.float32)
    params = init_params(kp, state_dim, action_dim, hidden_size)
    q_ref = reference_forward(x, u, params)

    # f32 compute path: tight parity with the PyTorch forward.
    q_f32 = jax.block_until_ready(
        ddpg_critic_forward(x, u, params, compute_dtype=jnp.float32))
    assert q_f32.shape == (batch, 1)
    assert jnp.allclose(q_f32, q_ref, atol=1e-5, rtol=1e-5), (q_f32, q_ref)

    # Default bf16-streamed path (f32 accumulation).
    q = jax.block_until_ready(ddpg_critic_forward(x, u, params))
    assert q.shape == (batch, 1)
    assert jnp.allclose(q, q_ref, atol=5e-2, rtol=5e-2), (q, q_ref)

    # Larger batch: exercises the multi-step grid, padding + final slice.
    big = 1000
    xb = jax.random.normal(kx, (big, state_dim), jnp.float32)
    ub = jax.random.normal(ku, (big, action_dim), jnp.float32)
    qb_ref = reference_forward(xb, ub, params)

    qb_f32 = jax.block_until_ready(
        ddpg_critic_forward(xb, ub, params, compute_dtype=jnp.float32))
    assert qb_f32.shape == (big, 1)
    assert jnp.allclose(qb_f32, qb_ref, atol=1e-4, rtol=1e-4)

    qb = jax.block_until_ready(ddpg_critic_forward(xb, ub, params))
    assert qb.shape == (big, 1)
    assert jnp.allclose(qb, qb_ref, atol=5e-2, rtol=5e-2)

    print("KERNEL_OK")
</pallas_src>

<mosaic_0001>
module attributes {stable_mosaic.version = 11 : i64} {
  func.func @_critic_kernel(%arg0: i32, %arg1: memref<2x16xf32, #tpu.memory_space<vmem>>, %arg2: memref<2x4xf32, #tpu.memory_space<vmem>>, %arg3: memref<16x32xf32, #tpu.memory_space<vmem>>, %arg4: memref<4x32xf32, #tpu.memory_space<vmem>>, %arg5: memref<1x32xf32, #tpu.memory_space<vmem>>, %arg6: memref<1x32xf32, #tpu.memory_space<vmem>>, %arg7: memref<1x1xf32, #tpu.memory_space<smem>>, %arg8: memref<2x1xf32, #tpu.memory_space<vmem>>) attributes {dimension_semantics = [#tpu.dimension_semantics<parallel>], iteration_bounds = array<i64: 1>, scalar_prefetch = 0 : i64, scratch_operands = 0 : i64, tpu.core_type = #tpu.core_type<tc>, window_params = [{transform_indices = @transform_0, window_bounds = array<i64: 2, 16>}, {transform_indices = @transform_1, window_bounds = array<i64: 2, 4>}, {pipeline_mode = #tpu.pipeline_mode<synchronous>, transform_indices = @transform_2, window_bounds = array<i64: 16, 32>}, {pipeline_mode = #tpu.pipeline_mode<synchronous>, transform_indices = @transform_3, window_bounds = array<i64: 4, 32>}, {pipeline_mode = #tpu.pipeline_mode<synchronous>, transform_indices = @transform_4, window_bounds = array<i64: 1, 32>}, {pipeline_mode = #tpu.pipeline_mode<synchronous>, transform_indices = @transform_5, window_bounds = array<i64: 1, 32>}, {transform_indices = @transform_6, window_bounds = array<i64: 1, 1>}, {transform_indices = @transform_7, window_bounds = array<i64: 2, 1>}]} {
    %c0 = arith.constant 0 : index
    %c0_0 = arith.constant 0 : index
    %0 = vector.load %arg1[%c0, %c0_0] : memref<2x16xf32, #tpu.memory_space<vmem>>, vector<2x16xf32>
    %c0_1 = arith.constant 0 : index
    %c0_2 = arith.constant 0 : index
    %1 = vector.load %arg3[%c0_1, %c0_2] : memref<16x32xf32, #tpu.memory_space<vmem>>, vector<16x32xf32>
    %cst = arith.constant dense<0.000000e+00> : vector<2x32xf32>
    %2 = tpu.matmul %0, %1, %cst {dimension_numbers = #tpu.dot_dimension_numbers<[1], [0], [0], [1], [0, 0, 1, 1], [], []>} : vector<2x16xf32>, vector<16x32xf32>, vector<2x32xf32> -> vector<2x32xf32>
    %c0_3 = arith.constant 0 : index
    %c0_4 = arith.constant 0 : index
    %3 = vector.load %arg2[%c0_3, %c0_4] : memref<2x4xf32, #tpu.memory_space<vmem>>, vector<2x4xf32>
    %c0_5 = arith.constant 0 : index
    %c0_6 = arith.constant 0 : index
    %4 = vector.load %arg4[%c0_5, %c0_6] : memref<4x32xf32, #tpu.memory_space<vmem>>, vector<4x32xf32>
    %cst_7 = arith.constant dense<0.000000e+00> : vector<2x32xf32>
    %5 = tpu.matmul %3, %4, %cst_7 {dimension_numbers = #tpu.dot_dimension_numbers<[1], [0], [0], [1], [0, 0, 1, 1], [], []>} : vector<2x4xf32>, vector<4x32xf32>, vector<2x32xf32> -> vector<2x32xf32>
    %6 = arith.addf %2, %5 : vector<2x32xf32>
    %c0_8 = arith.constant 0 : index
    %c0_9 = arith.constant 0 : index
    %7 = vector.load %arg5[%c0_8, %c0_9] : memref<1x32xf32, #tpu.memory_space<vmem>>, vector<1x32xf32>
    %8 = vector.broadcast %7 : vector<1x32xf32> to vector<2x32xf32>
    %9 = arith.addf %6, %8 : vector<2x32xf32>
    %cst_10 = arith.constant 0.000000e+00 : f32
    %10 = vector.broadcast %cst_10 : f32 to vector<2x32xf32>
    %11 = arith.maximumf %9, %10 : vector<2x32xf32>
    %c0_11 = arith.constant 0 : index
    %c0_12 = arith.constant 0 : index
    %12 = vector.load %arg6[%c0_11, %c0_12] : memref<1x32xf32, #tpu.memory_space<vmem>>, vector<1x32xf32>
    %13 = vector.broadcast %12 : vector<1x32xf32> to vector<2x32xf32>
    %14 = arith.mulf %11, %13 : vector<2x32xf32>
    %cst_13 = arith.constant dense<0.000000e+00> : vector<2xf32>
    %15 = vector.multi_reduction <add>, %14, %cst_13 [1] : vector<2x32xf32> to vector<2xf32>
    %16 = vector.shape_cast %15 : vector<2xf32> to vector<2x1xf32>
    %c0_14 = arith.constant 0 : index
    %c0_15 = arith.constant 0 : index
    %17 = memref.load %arg7[%c0_14, %c0_15] : memref<1x1xf32, #tpu.memory_space<smem>>
    %18 = vector.broadcast %17 : f32 to vector<2x1xf32>
    %19 = arith.addf %16, %18 : vector<2x1xf32>
    %c0_16 = arith.constant 0 : index
    %c0_17 = arith.constant 0 : index
    %20 = vector.load %arg8[%c0_16, %c0_17] : memref<2x1xf32, #tpu.memory_space<vmem>>, vector<2x1xf32>
    tpu.vector_store %arg8[%c0_16, %c0_17], %19 {strides = array<i32>} : memref<2x1xf32, #tpu.memory_space<vmem>>, vector<2x1xf32>,
    return
  }
  func.func @transform_0(%arg0: i32) -> (i32, i32) {
    %c0_i32 = arith.constant 0 : i32
    %c0_i32_0 = arith.constant 0 : i32
    return %arg0, %c0_i32 : i32, i32
  }
  func.func @transform_1(%arg0: i32) -> (i32, i32) {
    %c0_i32 = arith.constant 0 : i32
    %c0_i32_0 = arith.constant 0 : i32
    return %arg0, %c0_i32 : i32, i32
  }
  func.func @transform_2(%arg0: i32) -> (i32, i32) {
    %c0_i32 = arith.constant 0 : i32
    %c0_i32_0 = arith.constant 0 : i32
    %c0_i32_1 = arith.constant 0 : i32
    return %c0_i32, %c0_i32_0 : i32, i32
  }
  func.func @transform_3(%arg0: i32) -> (i32, i32) {
    %c0_i32 = arith.constant 0 : i32
    %c0_i32_0 = arith.constant 0 : i32
    %c0_i32_1 = arith.constant 0 : i32
    return %c0_i32, %c0_i32_0 : i32, i32
  }
  func.func @transform_4(%arg0: i32) -> (i32, i32) {
    %c0_i32 = arith.constant 0 : i32
    %c0_i32_0 = arith.constant 0 : i32
    %c0_i32_1 = arith.constant 0 : i32
    return %c0_i32, %c0_i32_0 : i32, i32
  }
  func.func @transform_5(%arg0: i32) -> (i32, i32) {
    %c0_i32 = arith.constant 0 : i32
    %c0_i32_0 = arith.constant 0 : i32
    %c0_i32_1 = arith.constant 0 : i32
    return %c0_i32, %c0_i32_0 : i32, i32
  }
  func.func @transform_6(%arg0: i32) -> (i32, i32) {
    %c0_i32 = arith.constant 0 : i32
    %c0_i32_0 = arith.constant 0 : i32
    %c0_i32_1 = arith.constant 0 : i32
    return %c0_i32, %c0_i32_0 : i32, i32
  }
  func.func @transform_7(%arg0: i32) -> (i32, i32) {
    %c0_i32 = arith.constant 0 : i32
    %c0_i32_0 = arith.constant 0 : i32
    return %arg0, %c0_i32 : i32, i32
  }
}

</mosaic_0001>

<llo_original>
// kernel: tpu_custom_call.1
$region0: #{tpu_custom_call.1}
  #allocation0 [shape = 'u32[]', space=smem, size = 0x4, offset = 0x4, fixed_abs, tag = 'smem constant byte address 0x4 - core index']
  #allocation1 [shape = 'u32[144,128]{1,0:T(1,128)}', space=vmem, size = 0x12000, scoped, tag = 'internal scratch']
  #allocation2 [shape = 'f32[1,1]{1,0:T(1,128)S(6)}', space=smem, size = 0x200, scoped, tag = 'scoped memory for tpu_custom_call.1']
  %s0 = inlined_call_operand.vmem [shape: f32[2,16], index: 0, kind: input, shape index: {}]
  %s1 = inlined_call_operand.hbm [shape: f32[2,4], index: 1, kind: input, shape index: {}]
  %s2 = inlined_call_operand.hbm [shape: f32[16,32], index: 2, kind: input, shape index: {}]
  %s3 = inlined_call_operand.vmem [shape: f32[4,32], index: 3, kind: input, shape index: {}]
  %s4 = inlined_call_operand.vmem [shape: f32[1,32], index: 4, kind: input, shape index: {}]
  %s5 = inlined_call_operand.vmem [shape: f32[1,32], index: 5, kind: input, shape index: {}]
  %s6 = inlined_call_operand.<no memory space> [shape: f32[1,1], index: 6, kind: input, shape index: {}]
  %s7 = inlined_call_operand.vmem [shape: f32[2,1], index: 7, kind: output, shape index: {}]
  %s8 = sld [smem:[#allocation0]]
  $region46: #{tpu_custom_call.1} parent=0
    _
  %s10 = ssub.s32 1, %s8
  %s11 = scalar_select 0, %s10, %s8
  %12 = sst [smem:[#allocation2]] %s6
  $region1: #{tpu_custom_call.1} parent=0
    #allocation3 [shape = 'u8[1024]{0}', space=vmem, size = 0x400, scoped, tag = 'input window, operand 1, single buffered']
    #allocation4 [shape = 's32[1]{0}', space=sflag, size = 0x4, scoped, tag = 'scoped memory for tpu_custom_call.1']
    #allocation5 [shape = 'u8[8192]{0}', space=vmem, size = 0x2000, scoped, tag = 'input window, operand 2, single buffered']
    #allocation6 [shape = 's32[1]{0}', space=sflag, size = 0x4, scoped, tag = 'scoped memory for tpu_custom_call.1']
    %13 = vsyncpa [#allocation4], 0
    %14 = vsyncpa [#allocation6], 0
    // Predicated region
    $region2: #{tpu_custom_call.1} parent=1 // pred_check
      _
    $region3: #{tpu_custom_call.1} parent=1 // pred_check_branch
      %16 = sbr.rel (0) target = $region5
    $region4: #{tpu_custom_call.1} parent=1 // pred_region
      _
    $region5: #{tpu_custom_call.1} parent=1 // pred_fallthru
      _
    // Predicated region
    $region6: #{tpu_custom_call.1} parent=1 // pred_check
      _
    $region7: #{tpu_custom_call.1} parent=1 // pred_check_branch
      %18 = sbr.rel (0) target = $region9
    $region8: #{tpu_custom_call.1} parent=1 // pred_region
      %s20 = ssub.s32 32, 32
      %21 = vsyncadd [#allocation4], %s20
      %s23 = sshll.u32 [#allocation3], 4
      %s24 = int_to_ptr.vmem [resolvable:$true] %s23
      %26 = dma.hbm_to_vmem [thread:$0]  %s1, 32, %s24, [#allocation4]
    $region9: #{tpu_custom_call.1} parent=1 // pred_fallthru
      _
    // Predicated region
    $region10: #{tpu_custom_call.1} parent=1 // pred_check
      _
    $region11: #{tpu_custom_call.1} parent=1 // pred_check_branch
      %28 = sbr.rel (0) target = $region13
    $region12: #{tpu_custom_call.1} parent=1 // pred_region
      %s30 = ssub.s32 256, 256
      %31 = vsyncadd [#allocation6], %s30
      %s32 = sshll.u32 [#allocation5], 4
      %s33 = int_to_ptr.vmem [resolvable:$true] %s32
      %38 = dma.hbm_to_vmem [thread:$0]  %s2, 256, %s33, [#allocation6], 128, 128, 8
    $region13: #{tpu_custom_call.1} parent=1 // pred_fallthru
      _
    // Predicated region
    $region14: #{tpu_custom_call.1} parent=1 // pred_check
      _
    $region15: #{tpu_custom_call.1} parent=1 // pred_check_branch
      %40 = sbr.rel (0) target = $region17
    $region16: #{tpu_custom_call.1} parent=1 // pred_region
      _
    $region17: #{tpu_custom_call.1} parent=1 // pred_fallthru
      _
    // Predicated region
    $region18: #{tpu_custom_call.1} parent=1 // pred_check
      _
    $region19: #{tpu_custom_call.1} parent=1 // pred_check_branch
      %42 = sbr.rel (0) target = $region21
    $region20: #{tpu_custom_call.1} parent=1 // pred_region
      _
    $region21: #{tpu_custom_call.1} parent=1 // pred_fallthru
      _
    // Predicated region
    $region22: #{tpu_custom_call.1} parent=1 // pred_check
      _
    $region23: #{tpu_custom_call.1} parent=1 // pred_check_branch
      %44 = sbr.rel (0) target = $region25
    $region24: #{tpu_custom_call.1} parent=1 // pred_region
      _
    $region25: #{tpu_custom_call.1} parent=1 // pred_fallthru
      _
    // Predicated region
    $region26: #{tpu_custom_call.1} parent=1 // pred_check
      _
    $region27: #{tpu_custom_call.1} parent=1 // pred_check_branch
      %46 = sbr.rel (0) target = $region29
    $region28: #{tpu_custom_call.1} parent=1 // pred_region
      _
    $region29: #{tpu_custom_call.1} parent=1 // pred_fallthru
      _
    // Predicated region
    $region30: #{tpu_custom_call.1} parent=1 // pred_check
      _
    $region31: #{tpu_custom_call.1} parent=1 // pred_check_branch
      %48 = sbr.rel (0) target = $region33
    $region32: #{tpu_custom_call.1} parent=1 // pred_region
      %49 = dma.done [#allocation4], 32
    $region33: #{tpu_custom_call.1} parent=1 // pred_fallthru
      _
    // Predicated region
    $region34: #{tpu_custom_call.1} parent=1 // pred_check
      _
    $region35: #{tpu_custom_call.1} parent=1 // pred_check_branch
      %51 = sbr.rel (0) target = $region37
    $region36: #{tpu_custom_call.1} parent=1 // pred_region
      %52 = dma.done [#allocation6], 256
    $region37: #{tpu_custom_call.1} parent=1 // pred_fallthru
      _
    %v53 = vld [vmem:[%s0] sm:$0x3]
    %v54 = vld [vmem:[#allocation5] sm:$0xff]
    %v55 = vld [vmem:[#allocation5 + $0x8] sm:$0xff]
    %v56 = vld [vmem:[#allocation3] sm:$0x3]
    %v57 = vld [vmem:[%s3] sm:$0xf]
    %vm58 = vcmask 31744
    %v60 = vsel %vm58, %v56, 0
    %vm62 = vcmask 1043456
    %v64 = vsel %vm62, %v57, 0
    %66 = vmatprep.subr.mxu0 0.0
    %67 = vmatpush1.msra.mxu0 0.0
    %68 = vmatprep.subr.mxu0 0.0
    %69 = vmatpush1.msra.mxu0 0.0
    %70 = vmatprep.subr.mxu0 0.0
    %71 = vmatpush1.msra.mxu0 0.0
    %72 = vmatprep.subr.mxu0 0.0
    %73 = vmatpush1.msra.mxu0 0.0
    %74 = vmatprep.subr.mxu0 0.0
    %75 = vmatpush1.msra.mxu0 0.0
    %76 = vmatprep.subr.mxu0 0.0
    %77 = vmatpush1.msra.mxu0 0.0
    %78 = vmatprep.subr.mxu0 0.0
    %79 = vmatpush1.msra.mxu0 0.0
    %80 = vmatprep.subr.mxu0 0.0
    %81 = vmatpush1.msra.mxu0 0.0
    %82 = vmatprep.subr.mxu0 0.0
    %83 = vmatpush1.msra.mxu0 0.0
    %84 = vmatprep.subr.mxu0 0.0
    %85 = vmatpush1.msra.mxu0 0.0
    %86 = vmatprep.subr.mxu0 0.0
    %87 = vmatpush1.msra.mxu0 0.0
    %88 = vmatprep.subr.mxu0 0.0
    %89 = vmatpush1.msra.mxu0 0.0
    %90 = vmatprep.subr.mxu0 0.0
    %91 = vmatpush1.msra.mxu0 0.0
    %92 = vmatprep.subr.mxu0 0.0
    %93 = vmatpush1.msra.mxu0 0.0
    %94 = vmatprep.subr.mxu0 0.0
    %95 = vmatpush1.msra.mxu0 0.0
    %96 = vmatprep.subr.mxu0 0.0
    %97 = vmatpush1.msra.mxu0 %v64
    %98 = vmatprep.subr.mxu0 0.0
    %99 = vmatpush2.msra.mxu0 0.0
    %100 = vmatprep.subr.mxu0 0.0
    %101 = vmatpush2.msra.mxu0 0.0
    %102 = vmatprep.subr.mxu0 0.0
    %103 = vmatpush2.msra.mxu0 0.0
    %104 = vmatprep.subr.mxu0 0.0
    %105 = vmatpush2.msra.mxu0 0.0
    %106 = vmatprep.subr.mxu0 0.0
    %107 = vmatpush2.msra.mxu0 0.0
    %108 = vmatprep.subr.mxu0 0.0
    %109 = vmatpush2.msra.mxu0 0.0
    %110 = vmatprep.subr.mxu0 0.0
    %111 = vmatpush2.msra.mxu0 0.0
    %112 = vmatprep.subr.mxu0 0.0
    %113 = vmatpush2.msra.mxu0 0.0
    %114 = vmatprep.subr.mxu0 0.0
    %115 = vmatpush2.msra.mxu0 0.0
    %116 = vmatprep.subr.mxu0 0.0
    %117 = vmatpush2.msra.mxu0 0.0
    %118 = vmatprep.subr.mxu0 0.0
    %119 = vmatpush2.msra.mxu0 0.0
    %120 = vmatprep.subr.mxu0 0.0
    %121 = vmatpush2.msra.mxu0 0.0
    %122 = vmatprep.subr.mxu0 0.0
    %123 = vmatpush2.msra.mxu0 0.0
    %124 = vmatprep.subr.mxu0 0.0
    %125 = vmatpush2.msra.mxu0 0.0
    %126 = vmatprep.subr.mxu0 0.0
    %127 = vmatpush2.msra.mxu0 0.0
    %128 = vmatprep.subr.mxu0 0.0
    %129 = vmatpush2.msra.mxu0 0.0
    %130 = vmatprep.mubr.f32.mxu0 0.0
    %131 = vmatmul.mubr.f32.gmra.mxu0 %v60
    %v132 = vpop.f32.mrf.mxu0
    %v133 = vadd.f32 0.0, %v132
    %v134 = vpop.f32.mrf.mxu0
    %135 = vdwg.mxu0
    %vm136 = vcmask 130048
    %v138 = vsel %vm136, %v53, 0
    %140 = vmatprep.subr.mxu0 0.0
    %141 = vmatpush1.msra.mxu0 0.0
    %142 = vmatprep.subr.mxu0 0.0
    %143 = vmatpush1.msra.mxu0 0.0
    %144 = vmatprep.subr.mxu0 0.0
    %145 = vmatpush1.msra.mxu0 0.0
    %146 = vmatprep.subr.mxu0 0.0
    %147 = vmatpush1.msra.mxu0 0.0
    %148 = vmatprep.subr.mxu0 0.0
    %149 = vmatpush1.msra.mxu0 0.0
    %150 = vmatprep.subr.mxu0 0.0
    %151 = vmatpush1.msra.mxu0 0.0
    %152 = vmatprep.subr.mxu0 0.0
    %153 = vmatpush1.msra.mxu0 0.0
    %154 = vmatprep.subr.mxu0 0.0
    %155 = vmatpush1.msra.mxu0 0.0
    %156 = vmatprep.subr.mxu0 0.0
    %157 = vmatpush1.msra.mxu0 0.0
    %158 = vmatprep.subr.mxu0 0.0
    %159 = vmatpush1.msra.mxu0 0.0
    %160 = vmatprep.subr.mxu0 0.0
    %161 = vmatpush1.msra.mxu0 0.0
    %162 = vmatprep.subr.mxu0 0.0
    %163 = vmatpush1.msra.mxu0 0.0
    %164 = vmatprep.subr.mxu0 0.0
    %165 = vmatpush1.msra.mxu0 0.0
    %166 = vmatprep.subr.mxu0 0.0
    %167 = vmatpush1.msra.mxu0 0.0
    %168 = vmatprep.subr.mxu0 0.0
    %169 = vmatpush1.msra.mxu0 %v55
    %170 = vmatprep.subr.mxu0 0.0
    %171 = vmatpush1.msra.mxu0 %v54
    %172 = vmatprep.subr.mxu0 0.0
    %173 = vmatpush2.msra.mxu0 0.0
    %174 = vmatprep.subr.mxu0 0.0
    %175 = vmatpush2.msra.mxu0 0.0
    %176 = vmatprep.subr.mxu0 0.0
    %177 = vmatpush2.msra.mxu0 0.0
    %178 = vmatprep.subr.mxu0 0.0
    %179 = vmatpush2.msra.mxu0 0.0
    %180 = vmatprep.subr.mxu0 0.0
    %181 = vmatpush2.msra.mxu0 0.0
    %182 = vmatprep.subr.mxu0 0.0
    %183 = vmatpush2.msra.mxu0 0.0
    %184 = vmatprep.subr.mxu0 0.0
    %185 = vmatpush2.msra.mxu0 0.0
    %186 = vmatprep.subr.mxu0 0.0
    %187 = vmatpush2.msra.mxu0 0.0
    %188 = vmatprep.subr.mxu0 0.0
    %189 = vmatpush2.msra.mxu0 0.0
    %190 = vmatprep.subr.mxu0 0.0
    %191 = vmatpush2.msra.mxu0 0.0
    %192 = vmatprep.subr.mxu0 0.0
    %193 = vmatpush2.msra.mxu0 0.0
    %194 = vmatprep.subr.mxu0 0.0
    %195 = vmatpush2.msra.mxu0 0.0
    %196 = vmatprep.subr.mxu0 0.0
    %197 = vmatpush2.msra.mxu0 0.0
    %198 = vmatprep.subr.mxu0 0.0
    %199 = vmatpush2.msra.mxu0 0.0
    %200 = vmatprep.subr.mxu0 0.0
    %201 = vmatpush2.msra.mxu0 0.0
    %202 = vmatprep.subr.mxu0 0.0
    %203 = vmatpush2.msra.mxu0 0.0
    %204 = vmatprep.mubr.f32.mxu0 0.0
    %205 = vmatmul.mubr.f32.gmra.mxu0 %v138
    %v206 = vpop.f32.mrf.mxu0
    %v207 = vadd.f32 %v133, %v206
    %v208 = vpop.f32.mrf.mxu0
    %209 = vdwg.mxu0
    %v210 = vld [vmem:[%s4] sm:$0x1]
    %v212 = vlaneseq
    %v213 = vshrl.u32 %v212, 7
    %v214 = vsub.s32 0, %v213
    %v215 = vrot.slane %v210, %v214
    %v217 = vadd.f32 %v207, %v215
    %v218 = vmax.f32 %v217, 0.0
    %v219 = vld [vmem:[%s5] sm:$0x1]
    %v221 = vlaneseq
    %v222 = vshrl.u32 %v221, 7
    %v223 = vsub.s32 0, %v222
    %v224 = vrot.slane %v219, %v223
    %v226 = vmul.f32 %v218, %v224
    %vm227 = vcmask 254976
    %v228 = vsel %vm227, %v226, 0.0
    %229 = vadd.xlane.f32.xlu0 %v228
    %v230 = vpop.xlane.xlu0 %229
    %s231 = sld [smem:[#allocation2]]
    %v232 = vstv %s231
    %v233 = vadd.f32 %v230, %v232
    %vm234 = vcmask 1024
    %235 = vst.msk [vmem:[%s7] sm:$0x3] %vm234, %v233
    // Predicated region
    $region38: #{tpu_custom_call.1} parent=1 // pred_check
      _
    $region39: #{tpu_custom_call.1} parent=1 // pred_check_branch
      %237 = sbr.rel (0) target = $region41
    $region40: #{tpu_custom_call.1} parent=1 // pred_region
      _
    $region41: #{tpu_custom_call.1} parent=1 // pred_fallthru
      _
    // Predicated region
    $region42: #{tpu_custom_call.1} parent=1 // pred_check
      _
    $region43: #{tpu_custom_call.1} parent=1 // pred_check_branch
      %239 = sbr.rel (0) target = $region45
    $region44: #{tpu_custom_call.1} parent=1 // pred_region
      _
    $region45: #{tpu_custom_call.1} parent=1 // pred_fallthru
      _
    %240 = vsyncpa [#allocation4], 1
    %241 = vsyncpa [#allocation6], 1

</llo_original>
